<compile_context>
chip_gen: v6e
topology: v6e:2x2x1
jax: 0.10.0
libtpu: 0.0.40
codegen_flags: <defaults>
</compile_context>

<pallas_src>
import functools

import jax
import jax.numpy as jnp
from jax.experimental import pallas as pl
from jax.experimental.pallas import tpu as pltpu


def _round_up(x, m):
    return (x + m - 1) // m * m


# ---------------------------------------------------------------------------
# Fused Pallas kernel: conv-as-matmul + BN stats + BN affine + ReLU
# ---------------------------------------------------------------------------
def _fused_block_kernel(p_ref, w_ref, gb_ref, o_ref, sum_ref, sq_ref, *,
                        m_total, tm, eps):
    # p_ref  : (tm, Kp)  bf16 im2col patch tile (zero-padded rows / K-cols)
    # w_ref  : (Kp, Cp)  bf16 conv weights (zero-padded)
    # gb_ref : (8,  Cp)  f32: row 0 = gamma, row 1 = beta (rest zero)
    # o_ref  : (Mp, Cp)  f32, resident in VMEM across the whole grid
    i = pl.program_id(0)

    @pl.when(i == 0)
    def _init():
        sum_ref[...] = jnp.zeros_like(sum_ref)
        sq_ref[...] = jnp.zeros_like(sq_ref)

    # Conv tile: bf16 x bf16 -> f32 accumulation on the MXU.  No conv bias:
    # train-mode BN absorbs any per-channel constant added before the stats,
    # and zero-padded rows then contribute exact zeros to sum / sumsq.
    y = jnp.dot(p_ref[...], w_ref[...], preferred_element_type=jnp.float32)

    sum_ref[...] += jnp.sum(y, axis=0, keepdims=True)
    sq_ref[...] += jnp.sum(y * y, axis=0, keepdims=True)

    r0 = pl.multiple_of(i * tm, tm)
    o_ref[pl.ds(r0, tm), :] = y

    @pl.when(i == pl.num_programs(0) - 1)
    def _finalize():
        inv_m = 1.0 / float(m_total)
        mean = sum_ref[...] * inv_m
        # One-pass (shifted-free) variance; clamped for safety.
        var = jnp.maximum(sq_ref[...] * inv_m - mean * mean, 0.0)
        scale = gb_ref[0:1, :] * jax.lax.rsqrt(var + eps)
        shift = gb_ref[1:2, :] - mean * scale

        # Chunked apply keeps live ranges to one (tm, Cp) tile at a time.
        def apply(j, carry):
            r = pl.multiple_of(j * tm, tm)
            blk = o_ref[pl.ds(r, tm), :]
            o_ref[pl.ds(r, tm), :] = jnp.maximum(blk * scale + shift, 0.0)
            return carry

        jax.lax.fori_loop(0, pl.num_programs(0), apply, 0)


def fused_conv_bn_relu_pallas(patches, w_mat, gb, m_total, *, tm):
    Mp, Kp = patches.shape
    Cp = w_mat.shape[1]
    num_tiles = Mp // tm

    kernel = functools.partial(_fused_block_kernel, m_total=m_total, tm=tm,
                               eps=1e-5)

    out_bytes = Mp * Cp * 4
    in_bytes = patches.size * 2 + w_mat.size * 2 + gb.size * 4
    cost = pl.CostEstimate(flops=2 * Mp * Kp * Cp,
                           transcendentals=Cp,
                           bytes_accessed=in_bytes + out_bytes)

    # VMEM: resident f32 output + double-buffered bf16 patch tiles + weights
    # + params + stats scratch.  Cap with headroom under v7x's 64 MiB.
    vmem_need = (out_bytes + 2 * tm * Kp * 2 + 2 * Kp * Cp * 2
                 + 2 * 8 * Cp * 4 + 4 * Cp * 4)
    vmem_limit = int(min(max(2 * vmem_need, 4 << 20), 48 << 20))

    return pl.pallas_call(
        kernel,
        out_shape=jax.ShapeDtypeStruct((Mp, Cp), jnp.float32),
        grid_spec=pltpu.PrefetchScalarGridSpec(
            num_scalar_prefetch=0,
            grid=(num_tiles,),
            in_specs=[
                pl.BlockSpec((tm, Kp), lambda i: (i, 0)),   # patch tiles stream
                pl.BlockSpec((Kp, Cp), lambda i: (0, 0)),   # weights resident
                pl.BlockSpec((8, Cp), lambda i: (0, 0)),    # gamma/beta block
            ],
            out_specs=pl.BlockSpec((Mp, Cp), lambda i: (0, 0)),  # resident out
            scratch_shapes=[pltpu.VMEM((1, Cp), jnp.float32),    # sum
                            pltpu.VMEM((1, Cp), jnp.float32)],   # sum of squares
        ),
        compiler_params=pltpu.CompilerParams(
            dimension_semantics=("arbitrary",),
            vmem_limit_bytes=vmem_limit,
        ),
        cost_estimate=cost,
    )(patches, w_mat, gb)


# ---------------------------------------------------------------------------
# EncoderBlock2d / Encoder2d forward (NHWC internally, NCHW at the boundary)
# ---------------------------------------------------------------------------
def _same_style_padding(H, W, ksize_eff, stride):
    Kh, Kw = ksize_eff
    Sh, Sw = stride
    ph = Kh - 1 - (Sh - (H - Kh) % Sh) % Sh
    pw = Kw - 1 - (Sw - (W - Kw) % Sw) % Sw
    return (ph // 2, ph - ph // 2), (pw // 2, pw - pw // 2)


def encoder_block_forward_nhwc(x, params, kernel_size, stride, dilation):
    """x: (N, H, W, Cin) -> (N, OH, OW, Cout), matching EncoderBlock2d.forward."""
    w, b, gamma, beta = params
    del b  # conv bias is exactly absorbed by train-mode BatchNorm -> skipped
    Kh, Kw = kernel_size
    Sh, Sw = stride
    Dh, Dw = dilation
    Kh_e = (Kh - 1) * Dh + 1
    Kw_e = (Kw - 1) * Dw + 1
    N, H, W_, Cin = x.shape

    (pt, pb), (pl_, pr) = _same_style_padding(H, W_, (Kh_e, Kw_e), (Sh, Sw))
    xp = jnp.pad(x, ((0, 0), (pt, pb), (pl_, pr), (0, 0)))
    Hp, Wp = H + pt + pb, W_ + pl_ + pr
    OH = (Hp - Kh_e) // Sh + 1
    OW = (Wp - Kw_e) // Sw + 1

    # im2col built directly in NHWC row order (kh, kw, cin): one concat on the
    # last axis, no 5-D transpose.
    # TODO(synk): move the im2col inside the kernel (halo DMA + Kh*Kw shifted
    #             sub-dots) to remove the Kh*Kw input-read amplification.
    cols = []
    for kh in range(Kh):
        for kw in range(Kw):
            cols.append(
                xp[:, kh * Dh: kh * Dh + (OH - 1) * Sh + 1: Sh,
                      kw * Dw: kw * Dw + (OW - 1) * Sw + 1: Sw, :]
            )
    patches = jnp.concatenate(cols, axis=-1)            # (N, OH, OW, Kh*Kw*Cin)

    Cout = w.shape[0]
    M = N * OH * OW
    K = Kh * Kw * Cin

    M16 = _round_up(M, 16)          # bf16 sublane packing
    tm = min(512, M16)              # streamed patch tile (degenerates to 1 step here)
    Mp = _round_up(M, tm)
    Kp = _round_up(K, 128)          # lane-dense contraction dim
    Cp = _round_up(Cout, 128)       # lane-dense output channels

    patches = patches.reshape(M, K).astype(jnp.bfloat16)
    patches = jnp.pad(patches, ((0, Mp - M), (0, Kp - K)))

    # PyTorch weight (Cout, Cin, Kh, Kw) -> (Kh, Kw, Cin, Cout) to match the
    # patch K ordering, then bf16 + pad to (Kp, Cp).
    w_mat = jnp.transpose(w, (2, 3, 1, 0)).reshape(K, Cout).astype(jnp.bfloat16)
    w_mat = jnp.pad(w_mat, ((0, Kp - K), (0, Cp - Cout)))

    # gamma / beta merged into a single sublane-aligned parameter block.
    gb = jnp.zeros((8, Cp), jnp.float32)
    gb = gb.at[0, :Cout].set(gamma).at[1, :Cout].set(beta)

    out = fused_conv_bn_relu_pallas(patches, w_mat, gb, M, tm=tm)
    return out[:M, :Cout].reshape(N, OH, OW, Cout)


def encoder2d_forward(x_nchw, block_params, kernel_sizes, strides, dilations):
    """Encoder2d.forward: returns (last_output, skip_list) in NCHW."""
    x = jnp.transpose(x_nchw, (0, 2, 3, 1))            # NCHW -> NHWC once
    skip_nhwc = []
    for params, ks, st, dl in zip(block_params, kernel_sizes, strides, dilations):
        x = encoder_block_forward_nhwc(x, params, ks, st, dl)
        skip_nhwc.append(x)
    to_nchw = lambda t: jnp.transpose(t, (0, 3, 1, 2))  # NHWC -> NCHW at boundary
    skip = [to_nchw(s) for s in skip_nhwc]
    return skip[-1], skip


# ---------------------------------------------------------------------------
# Pure-JAX reference (correctness check only)
# ---------------------------------------------------------------------------
def encoder_block_ref(x, params, kernel_size, stride, dilation):
    w, b, gamma, beta = params
    Kh, Kw = kernel_size
    Dh, Dw = dilation
    Kh_e = (Kh - 1) * Dh + 1
    Kw_e = (Kw - 1) * Dw + 1
    _, _, H, W = x.shape
    (pt, pb), (pl_, pr) = _same_style_padding(H, W, (Kh_e, Kw_e), stride)
    xp = jnp.pad(x, ((0, 0), (0, 0), (pt, pb), (pl_, pr)))
    y = jax.lax.conv_general_dilated(
        xp, w, window_strides=stride, padding="VALID", rhs_dilation=dilation,
        dimension_numbers=("NCHW", "OIHW", "NCHW"),
    ) + b.reshape(1, -1, 1, 1)
    mean = y.mean(axis=(0, 2, 3), keepdims=True)
    var = ((y - mean) ** 2).mean(axis=(0, 2, 3), keepdims=True)
    yn = (y - mean) * jax.lax.rsqrt(var + 1e-5)
    yn = yn * gamma.reshape(1, -1, 1, 1) + beta.reshape(1, -1, 1, 1)
    return jnp.maximum(yn, 0.0)


def encoder2d_ref(x, block_params, kernel_sizes, strides, dilations):
    skip = []
    for params, ks, st, dl in zip(block_params, kernel_sizes, strides, dilations):
        x = encoder_block_ref(x, params, ks, st, dl)
        skip.append(x)
    return x, skip


# ---------------------------------------------------------------------------
# Main
# ---------------------------------------------------------------------------
if __name__ == "__main__":
    key = jax.random.PRNGKey(0)

    # Encoder2d(channels=[4, 8, 16], kernel_size=(3, 3), stride=(2, 2))
    channels = [4, 8, 16]
    n_blocks = len(channels) - 1
    kernel_sizes = [(3, 3)] * n_blocks
    strides = [(2, 2)] * n_blocks
    dilations = [(1, 1)] * n_blocks      # dilated=False

    block_params = []
    for n in range(n_blocks):
        cin, cout = channels[n], channels[n + 1]
        kh, kw = kernel_sizes[n]
        key, kw_key, kb_key, kg_key, kbt_key = jax.random.split(key, 5)
        bound = 1.0 / (cin * kh * kw) ** 0.5
        w = jax.random.uniform(kw_key, (cout, cin, kh, kw), jnp.float32, -bound, bound)
        b = jax.random.uniform(kb_key, (cout,), jnp.float32, -bound, bound)
        gamma = 1.0 + 0.1 * jax.random.normal(kg_key, (cout,), jnp.float32)
        beta = 0.1 * jax.random.normal(kbt_key, (cout,), jnp.float32)
        block_params.append((w, b, gamma, beta))

    key, kx = jax.random.split(key)
    x = jax.random.normal(kx, (2, 4, 16, 16), jnp.float32)   # (N, C, H, W)

    fwd = jax.jit(lambda xx, pp: encoder2d_forward(xx, pp, kernel_sizes, strides, dilations))
    out, skip = fwd(x, block_params)
    out = jax.block_until_ready(out)
    skip = [jax.block_until_ready(s) for s in skip]

    # Sanity-check against a pure-JAX reference (includes the conv bias, which
    # train-mode BN cancels exactly).
    ref_out, ref_skip = encoder2d_ref(x, block_params, kernel_sizes, strides, dilations)
    assert out.shape == ref_out.shape == (2, 16, 4, 4)
    assert skip[0].shape == (2, 8, 8, 8)
    for got, ref in zip([out] + skip, [ref_out] + ref_skip):
        assert jnp.allclose(got, ref, rtol=2e-2, atol=2e-2), "mismatch vs reference"

    print("KERNEL_OK")
</pallas_src>

<mosaic_0001>
module attributes {stable_mosaic.version = 11 : i64} {
  func.func @_fused_block_kernel(%arg0: i32, %arg1: memref<128x128xbf16, #tpu.memory_space<vmem>>, %arg2: memref<128x128xbf16, #tpu.memory_space<vmem>>, %arg3: memref<8x128xf32, #tpu.memory_space<vmem>>, %arg4: memref<128x128xf32, #tpu.memory_space<vmem>>, %arg5: memref<1x128xf32, #tpu.memory_space<vmem>>, %arg6: memref<1x128xf32, #tpu.memory_space<vmem>>) attributes {dimension_semantics = [#tpu.dimension_semantics<arbitrary>], iteration_bounds = array<i64: 1>, scalar_prefetch = 0 : i64, scratch_operands = 2 : i64, tpu.core_type = #tpu.core_type<tc>, window_params = [{transform_indices = @transform_0, window_bounds = array<i64: 128, 128>}, {pipeline_mode = #tpu.pipeline_mode<synchronous>, transform_indices = @transform_1, window_bounds = array<i64: 128, 128>}, {pipeline_mode = #tpu.pipeline_mode<synchronous>, transform_indices = @transform_2, window_bounds = array<i64: 8, 128>}, {pipeline_mode = #tpu.pipeline_mode<synchronous>, transform_indices = @transform_3, window_bounds = array<i64: 128, 128>}]} {
    %c0_i32 = arith.constant 0 : i32
    %0 = arith.cmpi eq, %arg0, %c0_i32 : i32
    %1 = arith.extui %0 : i1 to i32
    %c0_i32_0 = arith.constant 0 : i32
    %2 = arith.cmpi ne, %1, %c0_i32_0 : i32
    scf.if %2 {
      %cst_17 = arith.constant 0.000000e+00 : f32
      %24 = vector.broadcast %cst_17 : f32 to vector<1x128xf32>
      %c0_18 = arith.constant 0 : index
      %c0_19 = arith.constant 0 : index
      %25 = vector.load %arg5[%c0_18, %c0_19] : memref<1x128xf32, #tpu.memory_space<vmem>>, vector<1x128xf32>
      tpu.vector_store %arg5[%c0_18, %c0_19], %24 {strides = array<i32>} : memref<1x128xf32, #tpu.memory_space<vmem>>, vector<1x128xf32>,
      %cst_20 = arith.constant 0.000000e+00 : f32
      %26 = vector.broadcast %cst_20 : f32 to vector<1x128xf32>
      %c0_21 = arith.constant 0 : index
      %c0_22 = arith.constant 0 : index
      %27 = vector.load %arg6[%c0_21, %c0_22] : memref<1x128xf32, #tpu.memory_space<vmem>>, vector<1x128xf32>
      tpu.vector_store %arg6[%c0_21, %c0_22], %26 {strides = array<i32>} : memref<1x128xf32, #tpu.memory_space<vmem>>, vector<1x128xf32>,
    } else {
    }
    %c0 = arith.constant 0 : index
    %c0_1 = arith.constant 0 : index
    %3 = vector.load %arg1[%c0, %c0_1] : memref<128x128xbf16, #tpu.memory_space<vmem>>, vector<128x128xbf16>
    %c0_2 = arith.constant 0 : index
    %c0_3 = arith.constant 0 : index
    %4 = vector.load %arg2[%c0_2, %c0_3] : memref<128x128xbf16, #tpu.memory_space<vmem>>, vector<128x128xbf16>
    %cst = arith.constant dense<0.000000e+00> : vector<128x128xf32>
    %5 = tpu.matmul %3, %4, %cst {dimension_numbers = #tpu.dot_dimension_numbers<[1], [0], [0], [1], [0, 0, 1, 1], [], []>} : vector<128x128xbf16>, vector<128x128xbf16>, vector<128x128xf32> -> vector<128x128xf32>
    %c0_4 = arith.constant 0 : index
    %c0_5 = arith.constant 0 : index
    %6 = vector.load %arg5[%c0_4, %c0_5] : memref<1x128xf32, #tpu.memory_space<vmem>>, vector<1x128xf32>
    %cst_6 = arith.constant dense<0.000000e+00> : vector<128xf32>
    %7 = vector.multi_reduction <add>, %5, %cst_6 [0] : vector<128x128xf32> to vector<128xf32>
    %8 = vector.shape_cast %7 : vector<128xf32> to vector<1x128xf32>
    %9 = arith.addf %6, %8 : vector<1x128xf32>
    %c0_7 = arith.constant 0 : index
    %c0_8 = arith.constant 0 : index
    %10 = vector.load %arg5[%c0_7, %c0_8] : memref<1x128xf32, #tpu.memory_space<vmem>>, vector<1x128xf32>
    tpu.vector_store %arg5[%c0_7, %c0_8], %9 {strides = array<i32>} : memref<1x128xf32, #tpu.memory_space<vmem>>, vector<1x128xf32>,
    %c0_9 = arith.constant 0 : index
    %c0_10 = arith.constant 0 : index
    %11 = vector.load %arg6[%c0_9, %c0_10] : memref<1x128xf32, #tpu.memory_space<vmem>>, vector<1x128xf32>
    %12 = arith.mulf %5, %5 : vector<128x128xf32>
    %cst_11 = arith.constant dense<0.000000e+00> : vector<128xf32>
    %13 = vector.multi_reduction <add>, %12, %cst_11 [0] : vector<128x128xf32> to vector<128xf32>
    %14 = vector.shape_cast %13 : vector<128xf32> to vector<1x128xf32>
    %15 = arith.addf %11, %14 : vector<1x128xf32>
    %c0_12 = arith.constant 0 : index
    %c0_13 = arith.constant 0 : index
    %16 = vector.load %arg6[%c0_12, %c0_13] : memref<1x128xf32, #tpu.memory_space<vmem>>, vector<1x128xf32>
    tpu.vector_store %arg6[%c0_12, %c0_13], %15 {strides = array<i32>} : memref<1x128xf32, #tpu.memory_space<vmem>>, vector<1x128xf32>,
    %c128_i32 = arith.constant 128 : i32
    %17 = arith.muli %arg0, %c128_i32 : i32
    %18 = tpu.assume_multiple %17, 128 : i32
    %19 = arith.index_cast %18 : i32 to index
    %c0_14 = arith.constant 0 : index
    %20 = vector.load %arg4[%19, %c0_14] : memref<128x128xf32, #tpu.memory_space<vmem>>, vector<128x128xf32>
    tpu.vector_store %arg4[%19, %c0_14], %5 {strides = array<i32>} : memref<128x128xf32, #tpu.memory_space<vmem>>, vector<128x128xf32>,
    %c0_i32_15 = arith.constant 0 : i32
    %21 = arith.cmpi eq, %arg0, %c0_i32_15 : i32
    %22 = arith.extui %21 : i1 to i32
    %c0_i32_16 = arith.constant 0 : i32
    %23 = arith.cmpi ne, %22, %c0_i32_16 : i32
    scf.if %23 {
      %c0_17 = arith.constant 0 : index
      %c0_18 = arith.constant 0 : index
      %24 = vector.load %arg5[%c0_17, %c0_18] : memref<1x128xf32, #tpu.memory_space<vmem>>, vector<1x128xf32>
      %cst_19 = arith.constant 7.812500e-03 : f32
      %25 = vector.broadcast %cst_19 : f32 to vector<1x128xf32>
      %26 = arith.mulf %24, %25 : vector<1x128xf32>
      %c0_20 = arith.constant 0 : index
      %c0_21 = arith.constant 0 : index
      %27 = vector.load %arg6[%c0_20, %c0_21] : memref<1x128xf32, #tpu.memory_space<vmem>>, vector<1x128xf32>
      %cst_22 = arith.constant 7.812500e-03 : f32
      %28 = vector.broadcast %cst_22 : f32 to vector<1x128xf32>
      %29 = arith.mulf %27, %28 : vector<1x128xf32>
      %30 = arith.mulf %26, %26 : vector<1x128xf32>
      %31 = arith.subf %29, %30 : vector<1x128xf32>
      %cst_23 = arith.constant 0.000000e+00 : f32
      %32 = vector.broadcast %cst_23 : f32 to vector<1x128xf32>
      %33 = arith.maximumf %31, %32 : vector<1x128xf32>
      %c0_24 = arith.constant 0 : index
      %c0_25 = arith.constant 0 : index
      %34 = vector.load %arg3[%c0_24, %c0_25] : memref<8x128xf32, #tpu.memory_space<vmem>>, vector<1x128xf32>
      %cst_26 = arith.constant 9.99999974E-6 : f32
      %35 = vector.broadcast %cst_26 : f32 to vector<1x128xf32>
      %36 = arith.addf %33, %35 : vector<1x128xf32>
      %37 = math.rsqrt %36 : vector<1x128xf32>
      %38 = arith.mulf %34, %37 : vector<1x128xf32>
      %c1 = arith.constant 1 : index
      %c0_27 = arith.constant 0 : index
      %39 = vector.load %arg3[%c1, %c0_27] : memref<8x128xf32, #tpu.memory_space<vmem>>, vector<1x128xf32>
      %40 = arith.mulf %26, %38 : vector<1x128xf32>
      %41 = arith.subf %39, %40 : vector<1x128xf32>
      %c0_i32_28 = arith.constant 0 : i32
      %c128_i32_29 = arith.constant 128 : i32
      %42 = arith.muli %c0_i32_28, %c128_i32_29 : i32
      %43 = tpu.assume_multiple %42, 128 : i32
      %44 = arith.index_cast %43 : i32 to index
      %c0_30 = arith.constant 0 : index
      %45 = vector.load %arg4[%44, %c0_30] : memref<128x128xf32, #tpu.memory_space<vmem>>, vector<128x128xf32>
      %46 = vector.broadcast %38 : vector<1x128xf32> to vector<128x128xf32>
      %47 = arith.mulf %45, %46 : vector<128x128xf32>
      %48 = vector.broadcast %41 : vector<1x128xf32> to vector<128x128xf32>
      %49 = arith.addf %47, %48 : vector<128x128xf32>
      %cst_31 = arith.constant 0.000000e+00 : f32
      %50 = vector.broadcast %cst_31 : f32 to vector<128x128xf32>
      %51 = arith.maximumf %49, %50 : vector<128x128xf32>
      %52 = arith.index_cast %43 : i32 to index
      %c0_32 = arith.constant 0 : index
      %53 = vector.load %arg4[%52, %c0_32] : memref<128x128xf32, #tpu.memory_space<vmem>>, vector<128x128xf32>
      tpu.vector_store %arg4[%52, %c0_32], %51 {strides = array<i32>} : memref<128x128xf32, #tpu.memory_space<vmem>>, vector<128x128xf32>,
      %c1_i32 = arith.constant 1 : i32
    } else {
    }
    return
  }
  func.func @transform_0(%arg0: i32) -> (i32, i32) {
    %c0_i32 = arith.constant 0 : i32
    %c0_i32_0 = arith.constant 0 : i32
    return %arg0, %c0_i32 : i32, i32
  }
  func.func @transform_1(%arg0: i32) -> (i32, i32) {
    %c0_i32 = arith.constant 0 : i32
    %c0_i32_0 = arith.constant 0 : i32
    %c0_i32_1 = arith.constant 0 : i32
    return %c0_i32, %c0_i32_0 : i32, i32
  }
  func.func @transform_2(%arg0: i32) -> (i32, i32) {
    %c0_i32 = arith.constant 0 : i32
    %c0_i32_0 = arith.constant 0 : i32
    %c0_i32_1 = arith.constant 0 : i32
    return %c0_i32, %c0_i32_0 : i32, i32
  }
  func.func @transform_3(%arg0: i32) -> (i32, i32) {
    %c0_i32 = arith.constant 0 : i32
    %c0_i32_0 = arith.constant 0 : i32
    %c0_i32_1 = arith.constant 0 : i32
    return %c0_i32, %c0_i32_0 : i32, i32
  }
}

module attributes {stable_mosaic.version = 11 : i64} {
  func.func @_fused_block_kernel(%arg0: i32, %arg1: memref<32x128xbf16, #tpu.memory_space<vmem>>, %arg2: memref<128x128xbf16, #tpu.memory_space<vmem>>, %arg3: memref<8x128xf32, #tpu.memory_space<vmem>>, %arg4: memref<32x128xf32, #tpu.memory_space<vmem>>, %arg5: memref<1x128xf32, #tpu.memory_space<vmem>>, %arg6: memref<1x128xf32, #tpu.memory_space<vmem>>) attributes {dimension_semantics = [#tpu.dimension_semantics<arbitrary>], iteration_bounds = array<i64: 1>, scalar_prefetch = 0 : i64, scratch_operands = 2 : i64, tpu.core_type = #tpu.core_type<tc>, window_params = [{transform_indices = @transform_0, window_bounds = array<i64: 32, 128>}, {pipeline_mode = #tpu.pipeline_mode<synchronous>, transform_indices = @transform_1, window_bounds = array<i64: 128, 128>}, {pipeline_mode = #tpu.pipeline_mode<synchronous>, transform_indices = @transform_2, window_bounds = array<i64: 8, 128>}, {pipeline_mode = #tpu.pipeline_mode<synchronous>, transform_indices = @transform_3, window_bounds = array<i64: 32, 128>}]} {
    %c0_i32 = arith.constant 0 : i32
    %0 = arith.cmpi eq, %arg0, %c0_i32 : i32
    %1 = arith.extui %0 : i1 to i32
    %c0_i32_0 = arith.constant 0 : i32
    %2 = arith.cmpi ne, %1, %c0_i32_0 : i32
    scf.if %2 {
      %cst_17 = arith.constant 0.000000e+00 : f32
      %24 = vector.broadcast %cst_17 : f32 to vector<1x128xf32>
      %c0_18 = arith.constant 0 : index
      %c0_19 = arith.constant 0 : index
      %25 = vector.load %arg5[%c0_18, %c0_19] : memref<1x128xf32, #tpu.memory_space<vmem>>, vector<1x128xf32>
      tpu.vector_store %arg5[%c0_18, %c0_19], %24 {strides = array<i32>} : memref<1x128xf32, #tpu.memory_space<vmem>>, vector<1x128xf32>,
      %cst_20 = arith.constant 0.000000e+00 : f32
      %26 = vector.broadcast %cst_20 : f32 to vector<1x128xf32>
      %c0_21 = arith.constant 0 : index
      %c0_22 = arith.constant 0 : index
      %27 = vector.load %arg6[%c0_21, %c0_22] : memref<1x128xf32, #tpu.memory_space<vmem>>, vector<1x128xf32>
      tpu.vector_store %arg6[%c0_21, %c0_22], %26 {strides = array<i32>} : memref<1x128xf32, #tpu.memory_space<vmem>>, vector<1x128xf32>,
    } else {
    }
    %c0 = arith.constant 0 : index
    %c0_1 = arith.constant 0 : index
    %3 = vector.load %arg1[%c0, %c0_1] : memref<32x128xbf16, #tpu.memory_space<vmem>>, vector<32x128xbf16>
    %c0_2 = arith.constant 0 : index
    %c0_3 = arith.constant 0 : index
    %4 = vector.load %arg2[%c0_2, %c0_3] : memref<128x128xbf16, #tpu.memory_space<vmem>>, vector<128x128xbf16>
    %cst = arith.constant dense<0.000000e+00> : vector<32x128xf32>
    %5 = tpu.matmul %3, %4, %cst {dimension_numbers = #tpu.dot_dimension_numbers<[1], [0], [0], [1], [0, 0, 1, 1], [], []>} : vector<32x128xbf16>, vector<128x128xbf16>, vector<32x128xf32> -> vector<32x128xf32>
    %c0_4 = arith.constant 0 : index
    %c0_5 = arith.constant 0 : index
    %6 = vector.load %arg5[%c0_4, %c0_5] : memref<1x128xf32, #tpu.memory_space<vmem>>, vector<1x128xf32>
    %cst_6 = arith.constant dense<0.000000e+00> : vector<128xf32>
    %7 = vector.multi_reduction <add>, %5, %cst_6 [0] : vector<32x128xf32> to vector<128xf32>
    %8 = vector.shape_cast %7 : vector<128xf32> to vector<1x128xf32>
    %9 = arith.addf %6, %8 : vector<1x128xf32>
    %c0_7 = arith.constant 0 : index
    %c0_8 = arith.constant 0 : index
    %10 = vector.load %arg5[%c0_7, %c0_8] : memref<1x128xf32, #tpu.memory_space<vmem>>, vector<1x128xf32>
    tpu.vector_store %arg5[%c0_7, %c0_8], %9 {strides = array<i32>} : memref<1x128xf32, #tpu.memory_space<vmem>>, vector<1x128xf32>,
    %c0_9 = arith.constant 0 : index
    %c0_10 = arith.constant 0 : index
    %11 = vector.load %arg6[%c0_9, %c0_10] : memref<1x128xf32, #tpu.memory_space<vmem>>, vector<1x128xf32>
    %12 = arith.mulf %5, %5 : vector<32x128xf32>
    %cst_11 = arith.constant dense<0.000000e+00> : vector<128xf32>
    %13 = vector.multi_reduction <add>, %12, %cst_11 [0] : vector<32x128xf32> to vector<128xf32>
    %14 = vector.shape_cast %13 : vector<128xf32> to vector<1x128xf32>
    %15 = arith.addf %11, %14 : vector<1x128xf32>
    %c0_12 = arith.constant 0 : index
    %c0_13 = arith.constant 0 : index
    %16 = vector.load %arg6[%c0_12, %c0_13] : memref<1x128xf32, #tpu.memory_space<vmem>>, vector<1x128xf32>
    tpu.vector_store %arg6[%c0_12, %c0_13], %15 {strides = array<i32>} : memref<1x128xf32, #tpu.memory_space<vmem>>, vector<1x128xf32>,
    %c32_i32 = arith.constant 32 : i32
    %17 = arith.muli %arg0, %c32_i32 : i32
    %18 = tpu.assume_multiple %17, 32 : i32
    %19 = arith.index_cast %18 : i32 to index
    %c0_14 = arith.constant 0 : index
    %20 = vector.load %arg4[%19, %c0_14] : memref<32x128xf32, #tpu.memory_space<vmem>>, vector<32x128xf32>
    tpu.vector_store %arg4[%19, %c0_14], %5 {strides = array<i32>} : memref<32x128xf32, #tpu.memory_space<vmem>>, vector<32x128xf32>,
    %c0_i32_15 = arith.constant 0 : i32
    %21 = arith.cmpi eq, %arg0, %c0_i32_15 : i32
    %22 = arith.extui %21 : i1 to i32
    %c0_i32_16 = arith.constant 0 : i32
    %23 = arith.cmpi ne, %22, %c0_i32_16 : i32
    scf.if %23 {
      %c0_17 = arith.constant 0 : index
      %c0_18 = arith.constant 0 : index
      %24 = vector.load %arg5[%c0_17, %c0_18] : memref<1x128xf32, #tpu.memory_space<vmem>>, vector<1x128xf32>
      %cst_19 = arith.constant 3.125000e-02 : f32
      %25 = vector.broadcast %cst_19 : f32 to vector<1x128xf32>
      %26 = arith.mulf %24, %25 : vector<1x128xf32>
      %c0_20 = arith.constant 0 : index
      %c0_21 = arith.constant 0 : index
      %27 = vector.load %arg6[%c0_20, %c0_21] : memref<1x128xf32, #tpu.memory_space<vmem>>, vector<1x128xf32>
      %cst_22 = arith.constant 3.125000e-02 : f32
      %28 = vector.broadcast %cst_22 : f32 to vector<1x128xf32>
      %29 = arith.mulf %27, %28 : vector<1x128xf32>
      %30 = arith.mulf %26, %26 : vector<1x128xf32>
      %31 = arith.subf %29, %30 : vector<1x128xf32>
      %cst_23 = arith.constant 0.000000e+00 : f32
      %32 = vector.broadcast %cst_23 : f32 to vector<1x128xf32>
      %33 = arith.maximumf %31, %32 : vector<1x128xf32>
      %c0_24 = arith.constant 0 : index
      %c0_25 = arith.constant 0 : index
      %34 = vector.load %arg3[%c0_24, %c0_25] : memref<8x128xf32, #tpu.memory_space<vmem>>, vector<1x128xf32>
      %cst_26 = arith.constant 9.99999974E-6 : f32
      %35 = vector.broadcast %cst_26 : f32 to vector<1x128xf32>
      %36 = arith.addf %33, %35 : vector<1x128xf32>
      %37 = math.rsqrt %36 : vector<1x128xf32>
      %38 = arith.mulf %34, %37 : vector<1x128xf32>
      %c1 = arith.constant 1 : index
      %c0_27 = arith.constant 0 : index
      %39 = vector.load %arg3[%c1, %c0_27] : memref<8x128xf32, #tpu.memory_space<vmem>>, vector<1x128xf32>
      %40 = arith.mulf %26, %38 : vector<1x128xf32>
      %41 = arith.subf %39, %40 : vector<1x128xf32>
      %c0_i32_28 = arith.constant 0 : i32
      %c32_i32_29 = arith.constant 32 : i32
      %42 = arith.muli %c0_i32_28, %c32_i32_29 : i32
      %43 = tpu.assume_multiple %42, 32 : i32
      %44 = arith.index_cast %43 : i32 to index
      %c0_30 = arith.constant 0 : index
      %45 = vector.load %arg4[%44, %c0_30] : memref<32x128xf32, #tpu.memory_space<vmem>>, vector<32x128xf32>
      %46 = vector.broadcast %38 : vector<1x128xf32> to vector<32x128xf32>
      %47 = arith.mulf %45, %46 : vector<32x128xf32>
      %48 = vector.broadcast %41 : vector<1x128xf32> to vector<32x128xf32>
      %49 = arith.addf %47, %48 : vector<32x128xf32>
      %cst_31 = arith.constant 0.000000e+00 : f32
      %50 = vector.broadcast %cst_31 : f32 to vector<32x128xf32>
      %51 = arith.maximumf %49, %50 : vector<32x128xf32>
      %52 = arith.index_cast %43 : i32 to index
      %c0_32 = arith.constant 0 : index
      %53 = vector.load %arg4[%52, %c0_32] : memref<32x128xf32, #tpu.memory_space<vmem>>, vector<32x128xf32>
      tpu.vector_store %arg4[%52, %c0_32], %51 {strides = array<i32>} : memref<32x128xf32, #tpu.memory_space<vmem>>, vector<32x128xf32>,
      %c1_i32 = arith.constant 1 : i32
    } else {
    }
    return
  }
  func.func @transform_0(%arg0: i32) -> (i32, i32) {
    %c0_i32 = arith.constant 0 : i32
    %c0_i32_0 = arith.constant 0 : i32
    return %arg0, %c0_i32 : i32, i32
  }
  func.func @transform_1(%arg0: i32) -> (i32, i32) {
    %c0_i32 = arith.constant 0 : i32
    %c0_i32_0 = arith.constant 0 : i32
    %c0_i32_1 = arith.constant 0 : i32
    return %c0_i32, %c0_i32_0 : i32, i32
  }
  func.func @transform_2(%arg0: i32) -> (i32, i32) {
    %c0_i32 = arith.constant 0 : i32
    %c0_i32_0 = arith.constant 0 : i32
    %c0_i32_1 = arith.constant 0 : i32
    return %c0_i32, %c0_i32_0 : i32, i32
  }
  func.func @transform_3(%arg0: i32) -> (i32, i32) {
    %c0_i32 = arith.constant 0 : i32
    %c0_i32_0 = arith.constant 0 : i32
    %c0_i32_1 = arith.constant 0 : i32
    return %c0_i32, %c0_i32_0 : i32, i32
  }
}

</mosaic_0001>

<llo_original>
// kernel: _lambda_.2
$region0: #{_lambda_.2}
  #allocation0 [shape = 'u32[]', space=smem, size = 0x4, offset = 0x4, fixed_abs, tag = 'smem constant byte address 0x4 - core index']
  #allocation1 [shape = 'u32[144,128]{1,0:T(1,128)}', space=vmem, size = 0x12000, scoped, tag = 'internal scratch']
  #allocation2 [shape = 'f32[1,128]{1,0:T(1,128)}', space=vmem, size = 0x200, scoped, tag = 'scratch operand']
  #allocation3 [shape = 'f32[1,128]{1,0:T(1,128)}', space=vmem, size = 0x200, scoped, tag = 'scratch operand']
  %s0 = inlined_call_operand.vmem [shape: bf16[128,128], index: 0, kind: input, shape index: {}]
  %s1 = inlined_call_operand.vmem [shape: bf16[128,128], index: 1, kind: input, shape index: {}]
  %s2 = inlined_call_operand.vmem [shape: f32[8,128], index: 2, kind: input, shape index: {}]
  %s3 = inlined_call_operand.vmem [shape: f32[128,128], index: 3, kind: output, shape index: {}]
  %s4 = sld [smem:[#allocation0]]
  $region30: #{_lambda_.2} parent=0
    _
  %s6 = ssub.s32 1, %s4
  %s7 = scalar_select 0, %s6, %s4
  // Predicated region
  $region2: #{_lambda_.2} parent=0 // pred_check
    _
  $region3: #{_lambda_.2} parent=0 // pred_check_branch
    %9 = sbr.rel (0) target = $region5
  $region4: #{_lambda_.2} parent=0 // pred_region
    _
  $region5: #{_lambda_.2} parent=0 // pred_fallthru
    _
  // Predicated region
  $region6: #{_lambda_.2} parent=0 // pred_check
    _
  $region7: #{_lambda_.2} parent=0 // pred_check_branch
    %11 = sbr.rel (0) target = $region9
  $region8: #{_lambda_.2} parent=0 // pred_region
    _
  $region9: #{_lambda_.2} parent=0 // pred_fallthru
    _
  // Predicated region
  $region10: #{_lambda_.2} parent=0 // pred_check
    _
  $region11: #{_lambda_.2} parent=0 // pred_check_branch
    %13 = sbr.rel (0) target = $region13
  $region12: #{_lambda_.2} parent=0 // pred_region
    _
  $region13: #{_lambda_.2} parent=0 // pred_fallthru
    _
  %p15 = scmp.eq.s32.totalorder 0, 0
  // Predicated region
  $region14: #{_lambda_.2} parent=0 // pred_check
    %p16 = pneg %p15
  $region15: #{_lambda_.2} parent=0 // pred_check_branch
    %18 = sbr.rel (%p16) target = $region17
  $region16: #{_lambda_.2} parent=0 // pred_region
    %19 = vst [vmem:[#allocation2] sm:$0x1] 0.0
    %20 = vst [vmem:[#allocation3] sm:$0x1] 0.0
  $region17: #{_lambda_.2} parent=0 // pred_fallthru
    _
  %v21 = vld [vmem:[%s0] sm:$0xf]
  %v22 = vld [vmem:[%s0 + $0x4] sm:$0xf]
  %v23 = vld [vmem:[%s0 + $0x8] sm:$0xf]
  %v24 = vld [vmem:[%s0 + $0xc] sm:$0xf]
  %v25 = vld [vmem:[%s0 + $0x10] sm:$0xf]
  %v26 = vld [vmem:[%s0 + $0x14] sm:$0xf]
  %v27 = vld [vmem:[%s0 + $0x18] sm:$0xf]
  %v28 = vld [vmem:[%s0 + $0x1c] sm:$0xf]
  %v29 = vld [vmem:[%s0 + $0x20] sm:$0xf]
  %v30 = vld [vmem:[%s0 + $0x24] sm:$0xf]
  %v31 = vld [vmem:[%s0 + $0x28] sm:$0xf]
  %v32 = vld [vmem:[%s0 + $0x2c] sm:$0xf]
  %v33 = vld [vmem:[%s0 + $0x30] sm:$0xf]
  %v34 = vld [vmem:[%s0 + $0x34] sm:$0xf]
  %v35 = vld [vmem:[%s0 + $0x38] sm:$0xf]
  %v36 = vld [vmem:[%s0 + $0x3c] sm:$0xf]
  %v37 = vld [vmem:[%s1] sm:$0xf]
  %v38 = vld [vmem:[%s1 + $0x4] sm:$0xf]
  %v39 = vld [vmem:[%s1 + $0x8] sm:$0xf]
  %v40 = vld [vmem:[%s1 + $0xc] sm:$0xf]
  %v41 = vld [vmem:[%s1 + $0x10] sm:$0xf]
  %v42 = vld [vmem:[%s1 + $0x14] sm:$0xf]
  %v43 = vld [vmem:[%s1 + $0x18] sm:$0xf]
  %v44 = vld [vmem:[%s1 + $0x1c] sm:$0xf]
  %v45 = vld [vmem:[%s1 + $0x20] sm:$0xf]
  %v46 = vld [vmem:[%s1 + $0x24] sm:$0xf]
  %v47 = vld [vmem:[%s1 + $0x28] sm:$0xf]
  %v48 = vld [vmem:[%s1 + $0x2c] sm:$0xf]
  %v49 = vld [vmem:[%s1 + $0x30] sm:$0xf]
  %v50 = vld [vmem:[%s1 + $0x34] sm:$0xf]
  %v51 = vld [vmem:[%s1 + $0x38] sm:$0xf]
  %v52 = vld [vmem:[%s1 + $0x3c] sm:$0xf]
  %v69 = vunpack.c.l.b16 %v21
  %v70 = vunpack.c.l.b16 %v22
  %v71 = vunpack.c.l.b16 %v23
  %v72 = vunpack.c.l.b16 %v24
  %v73 = vunpack.c.l.b16 %v25
  %v74 = vunpack.c.l.b16 %v26
  %v75 = vunpack.c.l.b16 %v27
  %v76 = vunpack.c.l.b16 %v28
  %v77 = vunpack.c.l.b16 %v29
  %v78 = vunpack.c.l.b16 %v30
  %v79 = vunpack.c.l.b16 %v31
  %v80 = vunpack.c.l.b16 %v32
  %v81 = vunpack.c.l.b16 %v33
  %v82 = vunpack.c.l.b16 %v34
  %v83 = vunpack.c.l.b16 %v35
  %v84 = vunpack.c.l.b16 %v36
  %v85 = vpack.c.b16 %v70, %v69
  %v86 = vpack.c.b16 %v72, %v71
  %v87 = vpack.c.b16 %v74, %v73
  %v88 = vpack.c.b16 %v76, %v75
  %v89 = vpack.c.b16 %v78, %v77
  %v90 = vpack.c.b16 %v80, %v79
  %v91 = vpack.c.b16 %v82, %v81
  %v92 = vpack.c.b16 %v84, %v83
  %v117 = vunpack.c.l.b16 %v37
  %v118 = vunpack.c.l.b16 %v38
  %v119 = vunpack.c.l.b16 %v39
  %v120 = vunpack.c.l.b16 %v40
  %v121 = vunpack.c.l.b16 %v41
  %v122 = vunpack.c.l.b16 %v42
  %v123 = vunpack.c.l.b16 %v43
  %v124 = vunpack.c.l.b16 %v44
  %v125 = vunpack.c.l.b16 %v45
  %v126 = vunpack.c.l.b16 %v46
  %v127 = vunpack.c.l.b16 %v47
  %v128 = vunpack.c.l.b16 %v48
  %v129 = vunpack.c.l.b16 %v49
  %v130 = vunpack.c.l.b16 %v50
  %v131 = vunpack.c.l.b16 %v51
  %v132 = vunpack.c.l.b16 %v52
  %v133 = vpack.c.b16 %v118, %v117
  %v134 = vpack.c.b16 %v120, %v119
  %v135 = vpack.c.b16 %v122, %v121
  %v136 = vpack.c.b16 %v124, %v123
  %v137 = vpack.c.b16 %v126, %v125
  %v138 = vpack.c.b16 %v128, %v127
  %v139 = vpack.c.b16 %v130, %v129
  %v140 = vpack.c.b16 %v132, %v131
  %149 = vmatprep.subr.bf16.mxu0 0
  %150 = vmatpush1.bf16.msra.mxu0 %v140
  %151 = vmatprep.subr.bf16.mxu0 0
  %152 = vmatpush1.bf16.msra.mxu0 %v139
  %153 = vmatprep.subr.bf16.mxu0 0
  %154 = vmatpush1.bf16.msra.mxu0 %v138
  %155 = vmatprep.subr.bf16.mxu0 0
  %156 = vmatpush1.bf16.msra.mxu0 %v137
  %157 = vmatprep.subr.bf16.mxu0 0
  %158 = vmatpush1.bf16.msra.mxu0 %v136
  %159 = vmatprep.subr.bf16.mxu0 0
  %160 = vmatpush1.bf16.msra.mxu0 %v135
  %161 = vmatprep.subr.bf16.mxu0 0
  %162 = vmatpush1.bf16.msra.mxu0 %v134
  %163 = vmatprep.subr.bf16.mxu0 0
  %164 = vmatpush1.bf16.msra.mxu0 %v133
  %165 = vmatprep.subr.bf16.mxu0 0
  %166 = vmatpush2.bf16.msra.mxu0 0
  %167 = vmatprep.subr.bf16.mxu0 0
  %168 = vmatpush2.bf16.msra.mxu0 0
  %169 = vmatprep.subr.bf16.mxu0 0
  %170 = vmatpush2.bf16.msra.mxu0 0
  %171 = vmatprep.subr.bf16.mxu0 0
  %172 = vmatpush2.bf16.msra.mxu0 0
  %173 = vmatprep.subr.bf16.mxu0 0
  %174 = vmatpush2.bf16.msra.mxu0 0
  %175 = vmatprep.subr.bf16.mxu0 0
  %176 = vmatpush2.bf16.msra.mxu0 0
  %177 = vmatprep.subr.bf16.mxu0 0
  %178 = vmatpush2.bf16.msra.mxu0 0
  %179 = vmatprep.subr.bf16.mxu0 0
  %180 = vmatpush2.bf16.msra.mxu0 0
  %181 = vmatprep.mubr.bf16.mxu0 0
  %182 = vmatmul.mubr.bf16.gmra.mxu0 %v85
  %v183 = vpop.f32.mrf.mxu0
  %v184 = vadd.f32 0.0, %v183
  %v185 = vpop.f32.mrf.mxu0
  %v186 = vpop.f32.mrf.mxu0
  %v187 = vadd.f32 0.0, %v186
  %v188 = vpop.f32.mrf.mxu0
  %189 = vmatprep.mubr.bf16.mxu0 0
  %190 = vmatmul.mubr.bf16.gmra.mxu0 %v86
  %v191 = vpop.f32.mrf.mxu0
  %v192 = vadd.f32 0.0, %v191
  %v193 = vpop.f32.mrf.mxu0
  %v194 = vpop.f32.mrf.mxu0
  %v195 = vadd.f32 0.0, %v194
  %v196 = vpop.f32.mrf.mxu0
  %197 = vmatprep.mubr.bf16.mxu0 0
  %198 = vmatmul.mubr.bf16.gmra.mxu0 %v87
  %v199 = vpop.f32.mrf.mxu0
  %v200 = vadd.f32 0.0, %v199
  %v201 = vpop.f32.mrf.mxu0
  %v202 = vpop.f32.mrf.mxu0
  %v203 = vadd.f32 0.0, %v202
  %v204 = vpop.f32.mrf.mxu0
  %205 = vmatprep.mubr.bf16.mxu0 0
  %206 = vmatmul.mubr.bf16.gmra.mxu0 %v88
  %v207 = vpop.f32.mrf.mxu0
  %v208 = vadd.f32 0.0, %v207
  %v209 = vpop.f32.mrf.mxu0
  %v210 = vpop.f32.mrf.mxu0
  %v211 = vadd.f32 0.0, %v210
  %v212 = vpop.f32.mrf.mxu0
  %213 = vmatprep.mubr.bf16.mxu0 0
  %214 = vmatmul.mubr.bf16.gmra.mxu0 %v89
  %v215 = vpop.f32.mrf.mxu0
  %v216 = vadd.f32 0.0, %v215
  %v217 = vpop.f32.mrf.mxu0
  %v218 = vpop.f32.mrf.mxu0
  %v219 = vadd.f32 0.0, %v218
  %v220 = vpop.f32.mrf.mxu0
  %221 = vmatprep.mubr.bf16.mxu0 0
  %222 = vmatmul.mubr.bf16.gmra.mxu0 %v90
  %v223 = vpop.f32.mrf.mxu0
  %v224 = vadd.f32 0.0, %v223
  %v225 = vpop.f32.mrf.mxu0
  %v226 = vpop.f32.mrf.mxu0
  %v227 = vadd.f32 0.0, %v226
  %v228 = vpop.f32.mrf.mxu0
  %229 = vmatprep.mubr.bf16.mxu0 0
  %230 = vmatmul.mubr.bf16.gmra.mxu0 %v91
  %v231 = vpop.f32.mrf.mxu0
  %v232 = vadd.f32 0.0, %v231
  %v233 = vpop.f32.mrf.mxu0
  %v234 = vpop.f32.mrf.mxu0
  %v235 = vadd.f32 0.0, %v234
  %v236 = vpop.f32.mrf.mxu0
  %237 = vmatprep.mubr.bf16.mxu0 0
  %238 = vmatmul.mubr.bf16.gmra.mxu0 %v92
  %v239 = vpop.f32.mrf.mxu0
  %v240 = vadd.f32 0.0, %v239
  %v241 = vpop.f32.mrf.mxu0
  %v242 = vpop.f32.mrf.mxu0
  %v243 = vadd.f32 0.0, %v242
  %v244 = vpop.f32.mrf.mxu0
  %245 = vdwg.mxu0
  %v246 = vld [vmem:[#allocation2] sm:$0x1]
  %v247 = vadd.f32 %v184, %v187
  %v248 = vadd.f32 %v247, %v192
  %v249 = vadd.f32 %v248, %v195
  %v250 = vadd.f32 %v249, %v200
  %v251 = vadd.f32 %v250, %v203
  %v252 = vadd.f32 %v251, %v208
  %v253 = vadd.f32 %v252, %v211
  %v254 = vadd.f32 %v253, %v216
  %v255 = vadd.f32 %v254, %v219
  %v256 = vadd.f32 %v255, %v224
  %v257 = vadd.f32 %v256, %v227
  %v258 = vadd.f32 %v257, %v232
  %v259 = vadd.f32 %v258, %v235
  %v260 = vadd.f32 %v259, %v240
  %v261 = vadd.f32 %v260, %v243
  %v262 = vrot.slane %v261, 4
  %v263 = vadd.f32 %v261, %v262
  %v264 = vrot.slane %v263, 2
  %v265 = vadd.f32 %v263, %v264
  %v266 = vrot.slane %v265, 1
  %v267 = vadd.f32 %v265, %v266
  %v268 = vadd.f32 %v246, %v267
  %269 = vst [vmem:[#allocation2] sm:$0x1] %v268
  %v270 = vld [vmem:[#allocation3] sm:$0x1]
  %v271 = vmul.f32 %v184, %v184
  %v272 = vmul.f32 %v187, %v187
  %v273 = vmul.f32 %v192, %v192
  %v274 = vmul.f32 %v195, %v195
  %v275 = vmul.f32 %v200, %v200
  %v276 = vmul.f32 %v203, %v203
  %v277 = vmul.f32 %v208, %v208
  %v278 = vmul.f32 %v211, %v211
  %v279 = vmul.f32 %v216, %v216
  %v280 = vmul.f32 %v219, %v219
  %v281 = vmul.f32 %v224, %v224
  %v282 = vmul.f32 %v227, %v227
  %v283 = vmul.f32 %v232, %v232
  %v284 = vmul.f32 %v235, %v235
  %v285 = vmul.f32 %v240, %v240
  %v286 = vmul.f32 %v243, %v243
  %v287 = vadd.f32 %v271, %v272
  %v288 = vadd.f32 %v287, %v273
  %v289 = vadd.f32 %v288, %v274
  %v290 = vadd.f32 %v289, %v275
  %v291 = vadd.f32 %v290, %v276
  %v292 = vadd.f32 %v291, %v277
  %v293 = vadd.f32 %v292, %v278
  %v294 = vadd.f32 %v293, %v279
  %v295 = vadd.f32 %v294, %v280
  %v296 = vadd.f32 %v295, %v281
  %v297 = vadd.f32 %v296, %v282
  %v298 = vadd.f32 %v297, %v283
  %v299 = vadd.f32 %v298, %v284
  %v300 = vadd.f32 %v299, %v285
  %v301 = vadd.f32 %v300, %v286
  %v302 = vrot.slane %v301, 4
  %v303 = vadd.f32 %v301, %v302
  %v304 = vrot.slane %v303, 2
  %v305 = vadd.f32 %v303, %v304
  %v306 = vrot.slane %v305, 1
  %v307 = vadd.f32 %v305, %v306
  %v308 = vadd.f32 %v270, %v307
  %309 = vst [vmem:[#allocation3] sm:$0x1] %v308
  %s310 = smul.u32 0, 128
  %s311 = scalar_lea.vmem %s3, %s310
  %312 = vst [vmem:[%s311] sm:$0xff] %v184
  %313 = vst [vmem:[%s311 + $0x8] sm:$0xff] %v187
  %314 = vst [vmem:[%s311 + $0x10] sm:$0xff] %v192
  %315 = vst [vmem:[%s311 + $0x18] sm:$0xff] %v195
  %316 = vst [vmem:[%s311 + $0x20] sm:$0xff] %v200
  %317 = vst [vmem:[%s311 + $0x28] sm:$0xff] %v203
  %318 = vst [vmem:[%s311 + $0x30] sm:$0xff] %v208
  %319 = vst [vmem:[%s311 + $0x38] sm:$0xff] %v211
  %320 = vst [vmem:[%s311 + $0x40] sm:$0xff] %v216
  %321 = vst [vmem:[%s311 + $0x48] sm:$0xff] %v219
  %322 = vst [vmem:[%s311 + $0x50] sm:$0xff] %v224
  %323 = vst [vmem:[%s311 + $0x58] sm:$0xff] %v227
  %324 = vst [vmem:[%s311 + $0x60] sm:$0xff] %v232
  %325 = vst [vmem:[%s311 + $0x68] sm:$0xff] %v235
  %326 = vst [vmem:[%s311 + $0x70] sm:$0xff] %v240
  %327 = vst [vmem:[%s311 + $0x78] sm:$0xff] %v243
  // Predicated region
  $region18: #{_lambda_.2} parent=0 // pred_check
    %p328 = pneg %p15
  $region19: #{_lambda_.2} parent=0 // pred_check_branch
    %330 = sbr.rel (%p328) target = $region21
  $region20: #{_lambda_.2} parent=0 // pred_region
    %v331 = vld [vmem:[#allocation2] sm:$0x1]
    %v332 = vmul.f32 %v331, 0.0078125
    %v333 = vld [vmem:[#allocation3] sm:$0x1]
    %v334 = vmul.f32 %v333, 0.0078125
    %v335 = vmul.f32 %v332, %v332
    %v336 = vsub.f32 %v334, %v335
    %v337 = vmax.f32 %v336, 0.0
    %v338 = vld [vmem:[%s2] sm:$0x1]
    %v339 = vadd.f32 %v337, 1e-05
    %v340 = vrsqrt.pop %v339
    %v341 = vmul.f32 %v338, %v340
    %v342 = vld [vmem:[%s2 + $0x1] sm:$0x1]
    %v343 = vmul.f32 %v332, %v341
    %v344 = vsub.f32 %v342, %v343
    %v345 = vld [vmem:[%s3] sm:$0xff]
    %v346 = vld [vmem:[%s3 + $0x8] sm:$0xff]
    %v347 = vld [vmem:[%s3 + $0x10] sm:$0xff]
    %v348 = vld [vmem:[%s3 + $0x18] sm:$0xff]
    %v349 = vld [vmem:[%s3 + $0x20] sm:$0xff]
    %v350 = vld [vmem:[%s3 + $0x28] sm:$0xff]
    %v351 = vld [vmem:[%s3 + $0x30] sm:$0xff]
    %v352 = vld [vmem:[%s3 + $0x38] sm:$0xff]
    %v353 = vld [vmem:[%s3 + $0x40] sm:$0xff]
    %v354 = vld [vmem:[%s3 + $0x48] sm:$0xff]
    %v355 = vld [vmem:[%s3 + $0x50] sm:$0xff]
    %v356 = vld [vmem:[%s3 + $0x58] sm:$0xff]
    %v357 = vld [vmem:[%s3 + $0x60] sm:$0xff]
    %v358 = vld [vmem:[%s3 + $0x68] sm:$0xff]
    %v359 = vld [vmem:[%s3 + $0x70] sm:$0xff]
    %v360 = vld [vmem:[%s3 + $0x78] sm:$0xff]
    %v361 = vlaneseq
    %v362 = vshrl.u32 %v361, 7
    %v363 = vsub.s32 0, %v362
    %v364 = vrot.slane %v341, %v363
    %v365 = vmul.f32 %v345, %v364
    %v366 = vmul.f32 %v346, %v364
    %v367 = vmul.f32 %v347, %v364
    %v368 = vmul.f32 %v348, %v364
    %v369 = vmul.f32 %v349, %v364
    %v370 = vmul.f32 %v350, %v364
    %v371 = vmul.f32 %v351, %v364
    %v372 = vmul.f32 %v352, %v364
    %v373 = vmul.f32 %v353, %v364
    %v374 = vmul.f32 %v354, %v364
    %v375 = vmul.f32 %v355, %v364
    %v376 = vmul.f32 %v356, %v364
    %v377 = vmul.f32 %v357, %v364
    %v378 = vmul.f32 %v358, %v364
    %v379 = vmul.f32 %v359, %v364
    %v380 = vmul.f32 %v360, %v364
    %v381 = vlaneseq
    %v382 = vshrl.u32 %v381, 7
    %v383 = vsub.s32 0, %v382
    %v384 = vrot.slane %v344, %v383
    %v385 = vadd.f32 %v365, %v384
    %v386 = vadd.f32 %v366, %v384
    %v387 = vadd.f32 %v367, %v384
    %v388 = vadd.f32 %v368, %v384
    %v389 = vadd.f32 %v369, %v384
    %v390 = vadd.f32 %v370, %v384
    %v391 = vadd.f32 %v371, %v384
    %v392 = vadd.f32 %v372, %v384
    %v393 = vadd.f32 %v373, %v384
    %v394 = vadd.f32 %v374, %v384
    %v395 = vadd.f32 %v375, %v384
    %v396 = vadd.f32 %v376, %v384
    %v397 = vadd.f32 %v377, %v384
    %v398 = vadd.f32 %v378, %v384
    %v399 = vadd.f32 %v379, %v384
    %v400 = vadd.f32 %v380, %v384
    %v401 = vmax.f32 %v385, 0.0
    %v402 = vmax.f32 %v386, 0.0
    %v403 = vmax.f32 %v387, 0.0
    %v404 = vmax.f32 %v388, 0.0
    %v405 = vmax.f32 %v389, 0.0
    %v406 = vmax.f32 %v390, 0.0
    %v407 = vmax.f32 %v391, 0.0
    %v408 = vmax.f32 %v392, 0.0
    %v409 = vmax.f32 %v393, 0.0
    %v410 = vmax.f32 %v394, 0.0
    %v411 = vmax.f32 %v395, 0.0
    %v412 = vmax.f32 %v396, 0.0
    %v413 = vmax.f32 %v397, 0.0
    %v414 = vmax.f32 %v398, 0.0
    %v415 = vmax.f32 %v399, 0.0
    %v416 = vmax.f32 %v400, 0.0
    %417 = vst [vmem:[%s3] sm:$0xff] %v401
    %418 = vst [vmem:[%s3 + $0x8] sm:$0xff] %v402
    %419 = vst [vmem:[%s3 + $0x10] sm:$0xff] %v403
    %420 = vst [vmem:[%s3 + $0x18] sm:$0xff] %v404
    %421 = vst [vmem:[%s3 + $0x20] sm:$0xff] %v405
    %422 = vst [vmem:[%s3 + $0x28] sm:$0xff] %v406
    %423 = vst [vmem:[%s3 + $0x30] sm:$0xff] %v407
    %424 = vst [vmem:[%s3 + $0x38] sm:$0xff] %v408
    %425 = vst [vmem:[%s3 + $0x40] sm:$0xff] %v409
    %426 = vst [vmem:[%s3 + $0x48] sm:$0xff] %v410
    %427 = vst [vmem:[%s3 + $0x50] sm:$0xff] %v411
    %428 = vst [vmem:[%s3 + $0x58] sm:$0xff] %v412
    %429 = vst [vmem:[%s3 + $0x60] sm:$0xff] %v413
    %430 = vst [vmem:[%s3 + $0x68] sm:$0xff] %v414
    %431 = vst [vmem:[%s3 + $0x70] sm:$0xff] %v415
    %432 = vst [vmem:[%s3 + $0x78] sm:$0xff] %v416
  $region21: #{_lambda_.2} parent=0 // pred_fallthru
    _
  // Predicated region
  $region22: #{_lambda_.2} parent=0 // pred_check
    _
  $region23: #{_lambda_.2} parent=0 // pred_check_branch
    %434 = sbr.rel (0) target = $region25
  $region24: #{_lambda_.2} parent=0 // pred_region
    _
  $region25: #{_lambda_.2} parent=0 // pred_fallthru
    _
  // Predicated region
  $region26: #{_lambda_.2} parent=0 // pred_check
    _
  $region27: #{_lambda_.2} parent=0 // pred_check_branch
    %436 = sbr.rel (0) target = $region29
  $region28: #{_lambda_.2} parent=0 // pred_region
    _
  $region29: #{_lambda_.2} parent=0 // pred_fallthru
    _

// kernel: _lambda_.3
$region0: #{_lambda_.3}
  #allocation0 [shape = 'u32[]', space=smem, size = 0x4, offset = 0x4, fixed_abs, tag = 'smem constant byte address 0x4 - core index']
  #allocation1 [shape = 'u32[144,128]{1,0:T(1,128)}', space=vmem, size = 0x12000, scoped, tag = 'internal scratch']
  #allocation2 [shape = 'f32[1,128]{1,0:T(1,128)}', space=vmem, size = 0x200, scoped, tag = 'scratch operand']
  #allocation3 [shape = 'f32[1,128]{1,0:T(1,128)}', space=vmem, size = 0x200, scoped, tag = 'scratch operand']
  %s0 = inlined_call_operand.vmem [shape: bf16[32,128], index: 0, kind: input, shape index: {}]
  %s1 = inlined_call_operand.vmem [shape: bf16[128,128], index: 1, kind: input, shape index: {}]
  %s2 = inlined_call_operand.vmem [shape: f32[8,128], index: 2, kind: input, shape index: {}]
  %s3 = inlined_call_operand.vmem [shape: f32[32,128], index: 3, kind: output, shape index: {}]
  %s4 = sld [smem:[#allocation0]]
  $region30: #{_lambda_.3} parent=0
    _
  %s6 = ssub.s32 1, %s4
  %s7 = scalar_select 0, %s6, %s4
  // Predicated region
  $region2: #{_lambda_.3} parent=0 // pred_check
    _
  $region3: #{_lambda_.3} parent=0 // pred_check_branch
    %9 = sbr.rel (0) target = $region5
  $region4: #{_lambda_.3} parent=0 // pred_region
    _
  $region5: #{_lambda_.3} parent=0 // pred_fallthru
    _
  // Predicated region
  $region6: #{_lambda_.3} parent=0 // pred_check
    _
  $region7: #{_lambda_.3} parent=0 // pred_check_branch
    %11 = sbr.rel (0) target = $region9
  $region8: #{_lambda_.3} parent=0 // pred_region
    _
  $region9: #{_lambda_.3} parent=0 // pred_fallthru
    _
  // Predicated region
  $region10: #{_lambda_.3} parent=0 // pred_check
    _
  $region11: #{_lambda_.3} parent=0 // pred_check_branch
    %13 = sbr.rel (0) target = $region13
  $region12: #{_lambda_.3} parent=0 // pred_region
    _
  $region13: #{_lambda_.3} parent=0 // pred_fallthru
    _
  %p15 = scmp.eq.s32.totalorder 0, 0
  // Predicated region
  $region14: #{_lambda_.3} parent=0 // pred_check
    %p16 = pneg %p15
  $region15: #{_lambda_.3} parent=0 // pred_check_branch
    %18 = sbr.rel (%p16) target = $region17
  $region16: #{_lambda_.3} parent=0 // pred_region
    %19 = vst [vmem:[#allocation2] sm:$0x1] 0.0
    %20 = vst [vmem:[#allocation3] sm:$0x1] 0.0
  $region17: #{_lambda_.3} parent=0 // pred_fallthru
    _
  %v21 = vld [vmem:[%s0] sm:$0xf]
  %v22 = vld [vmem:[%s0 + $0x4] sm:$0xf]
  %v23 = vld [vmem:[%s0 + $0x8] sm:$0xf]
  %v24 = vld [vmem:[%s0 + $0xc] sm:$0xf]
  %v25 = vld [vmem:[%s1] sm:$0xf]
  %v26 = vld [vmem:[%s1 + $0x4] sm:$0xf]
  %v27 = vld [vmem:[%s1 + $0x8] sm:$0xf]
  %v28 = vld [vmem:[%s1 + $0xc] sm:$0xf]
  %v29 = vld [vmem:[%s1 + $0x10] sm:$0xf]
  %v30 = vld [vmem:[%s1 + $0x14] sm:$0xf]
  %v31 = vld [vmem:[%s1 + $0x18] sm:$0xf]
  %v32 = vld [vmem:[%s1 + $0x1c] sm:$0xf]
  %v33 = vld [vmem:[%s1 + $0x20] sm:$0xf]
  %v34 = vld [vmem:[%s1 + $0x24] sm:$0xf]
  %v35 = vld [vmem:[%s1 + $0x28] sm:$0xf]
  %v36 = vld [vmem:[%s1 + $0x2c] sm:$0xf]
  %v37 = vld [vmem:[%s1 + $0x30] sm:$0xf]
  %v38 = vld [vmem:[%s1 + $0x34] sm:$0xf]
  %v39 = vld [vmem:[%s1 + $0x38] sm:$0xf]
  %v40 = vld [vmem:[%s1 + $0x3c] sm:$0xf]
  %v45 = vunpack.c.l.b16 %v21
  %v46 = vunpack.c.l.b16 %v22
  %v47 = vunpack.c.l.b16 %v23
  %v48 = vunpack.c.l.b16 %v24
  %v49 = vpack.c.b16 %v46, %v45
  %v50 = vpack.c.b16 %v48, %v47
  %v69 = vunpack.c.l.b16 %v25
  %v70 = vunpack.c.l.b16 %v26
  %v71 = vunpack.c.l.b16 %v27
  %v72 = vunpack.c.l.b16 %v28
  %v73 = vunpack.c.l.b16 %v29
  %v74 = vunpack.c.l.b16 %v30
  %v75 = vunpack.c.l.b16 %v31
  %v76 = vunpack.c.l.b16 %v32
  %v77 = vunpack.c.l.b16 %v33
  %v78 = vunpack.c.l.b16 %v34
  %v79 = vunpack.c.l.b16 %v35
  %v80 = vunpack.c.l.b16 %v36
  %v81 = vunpack.c.l.b16 %v37
  %v82 = vunpack.c.l.b16 %v38
  %v83 = vunpack.c.l.b16 %v39
  %v84 = vunpack.c.l.b16 %v40
  %v85 = vpack.c.b16 %v70, %v69
  %v86 = vpack.c.b16 %v72, %v71
  %v87 = vpack.c.b16 %v74, %v73
  %v88 = vpack.c.b16 %v76, %v75
  %v89 = vpack.c.b16 %v78, %v77
  %v90 = vpack.c.b16 %v80, %v79
  %v91 = vpack.c.b16 %v82, %v81
  %v92 = vpack.c.b16 %v84, %v83
  %101 = vmatprep.subr.bf16.mxu0 0
  %102 = vmatpush1.bf16.msra.mxu0 %v92
  %103 = vmatprep.subr.bf16.mxu0 0
  %104 = vmatpush1.bf16.msra.mxu0 %v91
  %105 = vmatprep.subr.bf16.mxu0 0
  %106 = vmatpush1.bf16.msra.mxu0 %v90
  %107 = vmatprep.subr.bf16.mxu0 0
  %108 = vmatpush1.bf16.msra.mxu0 %v89
  %109 = vmatprep.subr.bf16.mxu0 0
  %110 = vmatpush1.bf16.msra.mxu0 %v88
  %111 = vmatprep.subr.bf16.mxu0 0
  %112 = vmatpush1.bf16.msra.mxu0 %v87
  %113 = vmatprep.subr.bf16.mxu0 0
  %114 = vmatpush1.bf16.msra.mxu0 %v86
  %115 = vmatprep.subr.bf16.mxu0 0
  %116 = vmatpush1.bf16.msra.mxu0 %v85
  %117 = vmatprep.subr.bf16.mxu0 0
  %118 = vmatpush2.bf16.msra.mxu0 0
  %119 = vmatprep.subr.bf16.mxu0 0
  %120 = vmatpush2.bf16.msra.mxu0 0
  %121 = vmatprep.subr.bf16.mxu0 0
  %122 = vmatpush2.bf16.msra.mxu0 0
  %123 = vmatprep.subr.bf16.mxu0 0
  %124 = vmatpush2.bf16.msra.mxu0 0
  %125 = vmatprep.subr.bf16.mxu0 0
  %126 = vmatpush2.bf16.msra.mxu0 0
  %127 = vmatprep.subr.bf16.mxu0 0
  %128 = vmatpush2.bf16.msra.mxu0 0
  %129 = vmatprep.subr.bf16.mxu0 0
  %130 = vmatpush2.bf16.msra.mxu0 0
  %131 = vmatprep.subr.bf16.mxu0 0
  %132 = vmatpush2.bf16.msra.mxu0 0
  %133 = vmatprep.mubr.bf16.mxu0 0
  %134 = vmatmul.mubr.bf16.gmra.mxu0 %v49
  %v135 = vpop.f32.mrf.mxu0
  %v136 = vadd.f32 0.0, %v135
  %v137 = vpop.f32.mrf.mxu0
  %v138 = vpop.f32.mrf.mxu0
  %v139 = vadd.f32 0.0, %v138
  %v140 = vpop.f32.mrf.mxu0
  %141 = vmatprep.mubr.bf16.mxu0 0
  %142 = vmatmul.mubr.bf16.gmra.mxu0 %v50
  %v143 = vpop.f32.mrf.mxu0
  %v144 = vadd.f32 0.0, %v143
  %v145 = vpop.f32.mrf.mxu0
  %v146 = vpop.f32.mrf.mxu0
  %v147 = vadd.f32 0.0, %v146
  %v148 = vpop.f32.mrf.mxu0
  %149 = vdwg.mxu0
  %v150 = vld [vmem:[#allocation2] sm:$0x1]
  %v151 = vadd.f32 %v136, %v139
  %v152 = vadd.f32 %v151, %v144
  %v153 = vadd.f32 %v152, %v147
  %v154 = vrot.slane %v153, 4
  %v155 = vadd.f32 %v153, %v154
  %v156 = vrot.slane %v155, 2
  %v157 = vadd.f32 %v155, %v156
  %v158 = vrot.slane %v157, 1
  %v159 = vadd.f32 %v157, %v158
  %v160 = vadd.f32 %v150, %v159
  %161 = vst [vmem:[#allocation2] sm:$0x1] %v160
  %v162 = vld [vmem:[#allocation3] sm:$0x1]
  %v163 = vmul.f32 %v136, %v136
  %v164 = vmul.f32 %v139, %v139
  %v165 = vmul.f32 %v144, %v144
  %v166 = vmul.f32 %v147, %v147
  %v167 = vadd.f32 %v163, %v164
  %v168 = vadd.f32 %v167, %v165
  %v169 = vadd.f32 %v168, %v166
  %v170 = vrot.slane %v169, 4
  %v171 = vadd.f32 %v169, %v170
  %v172 = vrot.slane %v171, 2
  %v173 = vadd.f32 %v171, %v172
  %v174 = vrot.slane %v173, 1
  %v175 = vadd.f32 %v173, %v174
  %v176 = vadd.f32 %v162, %v175
  %177 = vst [vmem:[#allocation3] sm:$0x1] %v176
  %s178 = smul.u32 0, 32
  %s179 = scalar_lea.vmem %s3, %s178
  %180 = vst [vmem:[%s179] sm:$0xff] %v136
  %181 = vst [vmem:[%s179 + $0x8] sm:$0xff] %v139
  %182 = vst [vmem:[%s179 + $0x10] sm:$0xff] %v144
  %183 = vst [vmem:[%s179 + $0x18] sm:$0xff] %v147
  // Predicated region
  $region18: #{_lambda_.3} parent=0 // pred_check
    %p184 = pneg %p15
  $region19: #{_lambda_.3} parent=0 // pred_check_branch
    %186 = sbr.rel (%p184) target = $region21
  $region20: #{_lambda_.3} parent=0 // pred_region
    %v187 = vld [vmem:[#allocation2] sm:$0x1]
    %v188 = vmul.f32 %v187, 0.03125
    %v189 = vld [vmem:[#allocation3] sm:$0x1]
    %v190 = vmul.f32 %v189, 0.03125
    %v191 = vmul.f32 %v188, %v188
    %v192 = vsub.f32 %v190, %v191
    %v193 = vmax.f32 %v192, 0.0
    %v194 = vld [vmem:[%s2] sm:$0x1]
    %v195 = vadd.f32 %v193, 1e-05
    %v196 = vrsqrt.pop %v195
    %v197 = vmul.f32 %v194, %v196
    %v198 = vld [vmem:[%s2 + $0x1] sm:$0x1]
    %v199 = vmul.f32 %v188, %v197
    %v200 = vsub.f32 %v198, %v199
    %v201 = vld [vmem:[%s3] sm:$0xff]
    %v202 = vld [vmem:[%s3 + $0x8] sm:$0xff]
    %v203 = vld [vmem:[%s3 + $0x10] sm:$0xff]
    %v204 = vld [vmem:[%s3 + $0x18] sm:$0xff]
    %v205 = vlaneseq
    %v206 = vshrl.u32 %v205, 7
    %v207 = vsub.s32 0, %v206
    %v208 = vrot.slane %v197, %v207
    %v209 = vmul.f32 %v201, %v208
    %v210 = vmul.f32 %v202, %v208
    %v211 = vmul.f32 %v203, %v208
    %v212 = vmul.f32 %v204, %v208
    %v213 = vlaneseq
    %v214 = vshrl.u32 %v213, 7
    %v215 = vsub.s32 0, %v214
    %v216 = vrot.slane %v200, %v215
    %v217 = vadd.f32 %v209, %v216
    %v218 = vadd.f32 %v210, %v216
    %v219 = vadd.f32 %v211, %v216
    %v220 = vadd.f32 %v212, %v216
    %v221 = vmax.f32 %v217, 0.0
    %v222 = vmax.f32 %v218, 0.0
    %v223 = vmax.f32 %v219, 0.0
    %v224 = vmax.f32 %v220, 0.0
    %225 = vst [vmem:[%s3] sm:$0xff] %v221
    %226 = vst [vmem:[%s3 + $0x8] sm:$0xff] %v222
    %227 = vst [vmem:[%s3 + $0x10] sm:$0xff] %v223
    %228 = vst [vmem:[%s3 + $0x18] sm:$0xff] %v224
  $region21: #{_lambda_.3} parent=0 // pred_fallthru
    _
  // Predicated region
  $region22: #{_lambda_.3} parent=0 // pred_check
    _
  $region23: #{_lambda_.3} parent=0 // pred_check_branch
    %230 = sbr.rel (0) target = $region25
  $region24: #{_lambda_.3} parent=0 // pred_region
    _
  $region25: #{_lambda_.3} parent=0 // pred_fallthru
    _
  // Predicated region
  $region26: #{_lambda_.3} parent=0 // pred_check
    _
  $region27: #{_lambda_.3} parent=0 // pred_check_branch
    %232 = sbr.rel (0) target = $region29
  $region28: #{_lambda_.3} parent=0 // pred_region
    _
  $region29: #{_lambda_.3} parent=0 // pred_fallthru
    _

</llo_original>
